<compile_context>
chip_gen: v5e
topology: v5e:2x2
jax: 0.10.0
libtpu: 0.0.40
codegen_flags: <defaults>
</compile_context>

<pallas_src>
import jax
import jax.numpy as jnp
from jax.experimental import pallas as pl
from jax.experimental.pallas import tpu as pltpu

_LANE = 128


def _round_up(x, m):
    return ((x + m - 1) // m) * m


def _cdiv(a, b):
    return -(-a // b)


def _vmem_capacity_bytes():
    try:
        return int(pltpu.get_tpu_info().vmem_capacity_bytes)
    except Exception:
        return 64 * 1024 * 1024  # conservative fallback (v7x per-core VMEM)


def _fit_row_tile(m, tm_max):
    """Row tile <= tm_max (multiple of 16) that minimizes padded rows while
    keeping the number of row tiles (== weight passes in streaming mode)
    minimal."""
    n = _cdiv(m, tm_max)
    return _round_up(_cdiv(m, n), 16)


# ----------------------------- kernels --------------------------------------


def _ffn_resident_kernel(x_ref, w1_ref, b1_ref, w2_ref, b2_ref, o_ref):
    """W1/W2 fully VMEM-resident; one (row, col) output tile per grid step."""
    h = jnp.dot(x_ref[...], w1_ref[...], preferred_element_type=jnp.float32)
    h = jnp.maximum(h + b1_ref[...], 0.0)
    # TODO(synk): dropout omitted (inference semantics: identity).
    y = jnp.dot(h.astype(w2_ref.dtype), w2_ref[...],
                preferred_element_type=jnp.float32)
    o_ref[...] = (y + b2_ref[...]).astype(o_ref.dtype)


def _ffn_streaming_kernel(x_ref, w1_ref, b1_ref, w2_ref, b2_ref, o_ref,
                          acc_ref):
    """d_ff streamed through VMEM; grid axis 1 is the reduction axis."""
    k = pl.program_id(1)

    @pl.when(k == 0)
    def _init():
        acc_ref[...] = jnp.zeros_like(acc_ref)

    h = jnp.dot(x_ref[...], w1_ref[...], preferred_element_type=jnp.float32)
    h = jnp.maximum(h + b1_ref[...], 0.0)
    # TODO(synk): dropout omitted (inference semantics: identity).
    acc_ref[...] += jnp.dot(h.astype(w2_ref.dtype), w2_ref[...],
                            preferred_element_type=jnp.float32)

    @pl.when(k == pl.num_programs(1) - 1)
    def _finalize():
        o_ref[...] = (acc_ref[...] + b2_ref[...]).astype(o_ref.dtype)


# ------------------------- VMEM footprint estimates -------------------------


def _resident_bytes(tm, tn, dm_p, dff_p, w_bytes, out_bytes):
    x_buf = 2 * tm * dm_p * 2                 # bf16 x, double buffered
    out_buf = 2 * tm * tn * out_bytes         # output tile, double buffered
    h_tmp = tm * dff_p * (4 + 2)              # f32 hidden + bf16 cast copy
    y_tmp = tm * tn * 4                       # f32 second-matmul result
    bias = 2 * (dff_p + dm_p) * 4
    return 2 * w_bytes + x_buf + out_buf + h_tmp + y_tmp + bias


def _streaming_bytes(tm, tk, dm_p, out_bytes, wbuf):
    x_buf = 2 * tm * dm_p * 2
    w_buf = wbuf * 2 * dm_p * tk * 2          # W1 + W2 chunks, wbuf-buffered
    out_buf = 2 * tm * dm_p * out_bytes
    acc = tm * dm_p * 4
    h_tmp = tm * tk * (4 + 2)
    bias = 2 * (tk + dm_p) * 4
    return x_buf + w_buf + out_buf + acc + h_tmp + bias


# ------------------------------ wrappers -------------------------------------


def prepare_ffn_params(w1, b1, w2, b2):
    """Cast weights to bf16 and lane-align once. Call this outside the hot
    loop and reuse the result (it is a full HBM pass over the weights)."""
    d_model, d_ff = w1.shape
    dm_p = _round_up(d_model, _LANE)
    dff_p = _round_up(d_ff, _LANE)

    w1b = w1.astype(jnp.bfloat16)
    w2b = w2.astype(jnp.bfloat16)
    b1f = b1.astype(jnp.float32).reshape(1, d_ff)
    b2f = b2.astype(jnp.float32).reshape(1, d_model)
    if dm_p != d_model or dff_p != d_ff:
        # Zero padding is exact: padded x cols hit zero W1 rows; padded d_ff
        # cols give relu(0)=0 hidden hitting zero W2 rows; padded output cols
        # are sliced off by the caller.
        w1b = jnp.pad(w1b, ((0, dm_p - d_model), (0, dff_p - d_ff)))
        w2b = jnp.pad(w2b, ((0, dff_p - d_ff), (0, dm_p - d_model)))
        b1f = jnp.pad(b1f, ((0, 0), (0, dff_p - d_ff)))
        b2f = jnp.pad(b2f, ((0, 0), (0, dm_p - d_model)))
    return {"w1": w1b, "b1": b1f, "w2": w2b, "b2": b2f,
            "d_model": d_model, "d_ff": d_ff}


def positionwise_feed_forward_prepared(x, params):
    """x: (..., d_model); params from prepare_ffn_params."""
    w1p, b1p, w2p, b2p = params["w1"], params["b1"], params["w2"], params["b2"]
    d_model, d_ff = params["d_model"], params["d_ff"]
    dm_p, dff_p = w1p.shape
    assert x.shape[-1] == d_model

    lead_shape = x.shape[:-1]
    M = 1
    for s in lead_shape:
        M *= s
    out_dtype = x.dtype
    out_bytes = jnp.dtype(out_dtype).itemsize
    w_bytes = (w1p.size + w2p.size) * 2       # bf16 weights

    # ---- generation-aware VMEM budget --------------------------------------
    vmem_cap = _vmem_capacity_bytes()
    vmem_limit = max(32 * 1024 * 1024, vmem_cap - 16 * 1024 * 1024)
    budget = int(vmem_limit * 0.85)

    # ---- choose path and tile sizes -----------------------------------------
    tm_cands = (2048, 1024, 512, 256, 128)

    resident_tm_max = None
    for c in tm_cands:
        if _resident_bytes(c, dm_p, dm_p, dff_p, w_bytes, out_bytes) <= budget:
            resident_tm_max = c
            break

    if resident_tm_max is not None:
        mode = "resident"
        tm = _fit_row_tile(M, resident_tm_max)
        tk, wbuf = None, 2
    else:
        mode = "streaming"
        units = dff_p // _LANE
        tk_cands = [t for t in (1024, 512, 256, 128)
                    if t // _LANE <= units and units % (t // _LANE) == 0]
        if not tk_cands:
            tk_cands = [_LANE]
        tm, tk = None, None
        for c in tm_cands:                     # grow the row tile first (AI knob)
            for t in tk_cands:
                if _streaming_bytes(c, t, dm_p, out_bytes, 2) <= budget:
                    tm, tk = c, t
                    break
            if tm is not None:
                break
        if tm is None:                         # last resort: smallest tiles
            tm, tk = 128, tk_cands[-1]
        tm = _fit_row_tile(M, tm)
        # Extra weight-chunk buffer only when the row tile had to stay small
        # (exposed weight DMA) and there is VMEM headroom for it.
        wbuf = 3 if (tm < 1024 and
                     _streaming_bytes(tm, tk, dm_p, out_bytes, 3) <= budget) else 2

    M_p = _round_up(M, tm)
    n_rows = M_p // tm

    # ---- flatten + (only if needed) pad x -----------------------------------
    x2d = x.reshape(M, d_model).astype(jnp.bfloat16)
    if M_p != M or dm_p != d_model:
        x2d = jnp.pad(x2d, ((0, M_p - M), (0, dm_p - d_model)))

    if mode == "resident":
        # Column split so both v7x TensorCores have work when there is only a
        # single row tile; harmless elsewhere (recomputed first matmul is tiny
        # at such M).
        if n_rows == 1 and dm_p % 256 == 0:
            tn = dm_p // 2
        else:
            tn = dm_p
        n_cols = dm_p // tn

        cost = pl.CostEstimate(
            flops=2 * M_p * dff_p * dm_p * (1 + n_cols),
            transcendentals=0,
            bytes_accessed=(x2d.size * 2 + w_bytes
                            + (b1p.size + b2p.size) * 4
                            + M_p * dm_p * out_bytes),
        )
        out2d = pl.pallas_call(
            _ffn_resident_kernel,
            out_shape=jax.ShapeDtypeStruct((M_p, dm_p), out_dtype),
            grid_spec=pltpu.PrefetchScalarGridSpec(
                num_scalar_prefetch=0,
                grid=(n_rows, n_cols),
                in_specs=[
                    pl.BlockSpec((tm, dm_p), lambda i, j: (i, 0)),      # x rows
                    pl.BlockSpec((dm_p, dff_p), lambda i, j: (0, 0)),   # W1 (resident)
                    pl.BlockSpec((1, dff_p), lambda i, j: (0, 0)),      # b1
                    pl.BlockSpec((dff_p, tn), lambda i, j: (0, j)),     # W2 cols
                    pl.BlockSpec((1, tn), lambda i, j: (0, j)),         # b2 cols
                ],
                out_specs=pl.BlockSpec((tm, tn), lambda i, j: (i, j)),
            ),
            compiler_params=pltpu.CompilerParams(
                dimension_semantics=("parallel", "parallel"),
                vmem_limit_bytes=vmem_limit,
            ),
            cost_estimate=cost,
        )(x2d, w1p, b1p, w2p, b2p)
    else:
        n_k = dff_p // tk
        wspec_kwargs = dict(pipeline_mode=pl.Buffered(3)) if wbuf == 3 else {}
        cost = pl.CostEstimate(
            flops=4 * M_p * dm_p * dff_p,
            transcendentals=0,
            bytes_accessed=(x2d.size * 2
                            + n_rows * w_bytes                      # weight re-reads
                            + n_rows * (b1p.size + b2p.size) * 4
                            + M_p * dm_p * out_bytes),
        )
        out2d = pl.pallas_call(
            _ffn_streaming_kernel,
            out_shape=jax.ShapeDtypeStruct((M_p, dm_p), out_dtype),
            grid_spec=pltpu.PrefetchScalarGridSpec(
                num_scalar_prefetch=0,
                grid=(n_rows, n_k),
                in_specs=[
                    pl.BlockSpec((tm, dm_p), lambda i, k: (i, 0)),              # x rows
                    pl.BlockSpec((dm_p, tk), lambda i, k: (0, k), **wspec_kwargs),  # W1 chunk
                    pl.BlockSpec((1, tk), lambda i, k: (0, k)),                 # b1 chunk
                    pl.BlockSpec((tk, dm_p), lambda i, k: (k, 0), **wspec_kwargs),  # W2 chunk
                    pl.BlockSpec((1, dm_p), lambda i, k: (0, 0)),               # b2
                ],
                out_specs=pl.BlockSpec((tm, dm_p), lambda i, k: (i, 0)),
                scratch_shapes=[pltpu.VMEM((tm, dm_p), jnp.float32)],
            ),
            compiler_params=pltpu.CompilerParams(
                dimension_semantics=("parallel", "arbitrary"),
                vmem_limit_bytes=vmem_limit,
            ),
            cost_estimate=cost,
        )(x2d, w1p, b1p, w2p, b2p)

    return out2d[:M, :d_model].reshape(*lead_shape, d_model)


def positionwise_feed_forward(x, w1, b1, w2, b2):
    """Convenience wrapper. For repeated calls, hoist prepare_ffn_params out
    of the hot loop and call positionwise_feed_forward_prepared directly."""
    return positionwise_feed_forward_prepared(x, prepare_ffn_params(w1, b1, w2, b2))


def _reference(x, w1, b1, w2, b2):
    h = jnp.maximum(jnp.einsum("bsd,df->bsf", x, w1) + b1, 0.0)
    return jnp.einsum("bsf,fd->bsd", h, w2) + b2


if __name__ == "__main__":
    key = jax.random.PRNGKey(0)
    batch, seq, d_model, d_ff = 2, 8, 32, 64

    k_x, k_w1, k_b1, k_w2, k_b2 = jax.random.split(key, 5)
    x = jax.random.normal(k_x, (batch, seq, d_model), dtype=jnp.float32)

    # Deterministic parameter init (uniform, roughly matching nn.Linear scale).
    lim1 = 1.0 / (d_model ** 0.5)
    lim2 = 1.0 / (d_ff ** 0.5)
    w1 = jax.random.uniform(k_w1, (d_model, d_ff), jnp.float32, -lim1, lim1)
    b1 = jax.random.uniform(k_b1, (d_ff,), jnp.float32, -lim1, lim1)
    w2 = jax.random.uniform(k_w2, (d_ff, d_model), jnp.float32, -lim2, lim2)
    b2 = jax.random.uniform(k_b2, (d_model,), jnp.float32, -lim2, lim2)

    # Production path: weights cast/padded once, reused across calls.
    params = prepare_ffn_params(w1, b1, w2, b2)
    out = positionwise_feed_forward_prepared(x, params)
    out = jax.block_until_ready(out)

    ref = _reference(x, w1, b1, w2, b2)
    assert out.shape == (batch, seq, d_model)
    # bf16 MXU inputs (f32 accumulation) -> compare against f32 ref with a
    # correspondingly widened tolerance.
    assert jnp.allclose(out, ref, atol=3e-2, rtol=3e-2)

    print("KERNEL_OK")
</pallas_src>

<mosaic_0001>
module attributes {stable_mosaic.version = 11 : i64} {
  func.func @_ffn_resident_kernel(%arg0: i32, %arg1: i32, %arg2: memref<16x128xbf16, #tpu.memory_space<vmem>>, %arg3: memref<128x128xbf16, #tpu.memory_space<vmem>>, %arg4: memref<1x128xf32, #tpu.memory_space<vmem>>, %arg5: memref<128x128xbf16, #tpu.memory_space<vmem>>, %arg6: memref<1x128xf32, #tpu.memory_space<vmem>>, %arg7: memref<16x128xf32, #tpu.memory_space<vmem>>) attributes {dimension_semantics = [#tpu.dimension_semantics<parallel>, #tpu.dimension_semantics<parallel>], iteration_bounds = array<i64: 1, 1>, scalar_prefetch = 0 : i64, scratch_operands = 0 : i64, tpu.core_type = #tpu.core_type<tc>, window_params = [{transform_indices = @transform_0, window_bounds = array<i64: 16, 128>}, {pipeline_mode = #tpu.pipeline_mode<synchronous>, transform_indices = @transform_1, window_bounds = array<i64: 128, 128>}, {pipeline_mode = #tpu.pipeline_mode<synchronous>, transform_indices = @transform_2, window_bounds = array<i64: 1, 128>}, {transform_indices = @transform_3, window_bounds = array<i64: 128, 128>}, {transform_indices = @transform_4, window_bounds = array<i64: 1, 128>}, {transform_indices = @transform_5, window_bounds = array<i64: 16, 128>}]} {
    %c0 = arith.constant 0 : index
    %c0_0 = arith.constant 0 : index
    %0 = vector.load %arg2[%c0, %c0_0] : memref<16x128xbf16, #tpu.memory_space<vmem>>, vector<16x128xbf16>
    %c0_1 = arith.constant 0 : index
    %c0_2 = arith.constant 0 : index
    %1 = vector.load %arg3[%c0_1, %c0_2] : memref<128x128xbf16, #tpu.memory_space<vmem>>, vector<128x128xbf16>
    %cst = arith.constant dense<0.000000e+00> : vector<16x128xf32>
    %2 = tpu.matmul %0, %1, %cst {dimension_numbers = #tpu.dot_dimension_numbers<[1], [0], [0], [1], [0, 0, 1, 1], [], []>} : vector<16x128xbf16>, vector<128x128xbf16>, vector<16x128xf32> -> vector<16x128xf32>
    %c0_3 = arith.constant 0 : index
    %c0_4 = arith.constant 0 : index
    %3 = vector.load %arg4[%c0_3, %c0_4] : memref<1x128xf32, #tpu.memory_space<vmem>>, vector<1x128xf32>
    %4 = vector.broadcast %3 : vector<1x128xf32> to vector<16x128xf32>
    %5 = arith.addf %2, %4 : vector<16x128xf32>
    %cst_5 = arith.constant 0.000000e+00 : f32
    %6 = vector.broadcast %cst_5 : f32 to vector<16x128xf32>
    %7 = arith.maximumf %5, %6 : vector<16x128xf32>
    %8 = arith.truncf %7 : vector<16x128xf32> to vector<16x128xbf16>
    %c0_6 = arith.constant 0 : index
    %c0_7 = arith.constant 0 : index
    %9 = vector.load %arg5[%c0_6, %c0_7] : memref<128x128xbf16, #tpu.memory_space<vmem>>, vector<128x128xbf16>
    %cst_8 = arith.constant dense<0.000000e+00> : vector<16x128xf32>
    %10 = tpu.matmul %8, %9, %cst_8 {dimension_numbers = #tpu.dot_dimension_numbers<[1], [0], [0], [1], [0, 0, 1, 1], [], []>} : vector<16x128xbf16>, vector<128x128xbf16>, vector<16x128xf32> -> vector<16x128xf32>
    %c0_9 = arith.constant 0 : index
    %c0_10 = arith.constant 0 : index
    %11 = vector.load %arg6[%c0_9, %c0_10] : memref<1x128xf32, #tpu.memory_space<vmem>>, vector<1x128xf32>
    %12 = vector.broadcast %11 : vector<1x128xf32> to vector<16x128xf32>
    %13 = arith.addf %10, %12 : vector<16x128xf32>
    %c0_11 = arith.constant 0 : index
    %c0_12 = arith.constant 0 : index
    %14 = vector.load %arg7[%c0_11, %c0_12] : memref<16x128xf32, #tpu.memory_space<vmem>>, vector<16x128xf32>
    tpu.vector_store %arg7[%c0_11, %c0_12], %13 {strides = array<i32>} : memref<16x128xf32, #tpu.memory_space<vmem>>, vector<16x128xf32>,
    return
  }
  func.func @transform_0(%arg0: i32, %arg1: i32) -> (i32, i32) {
    %c0_i32 = arith.constant 0 : i32
    %c0_i32_0 = arith.constant 0 : i32
    return %arg0, %c0_i32 : i32, i32
  }
  func.func @transform_1(%arg0: i32, %arg1: i32) -> (i32, i32) {
    %c0_i32 = arith.constant 0 : i32
    %c0_i32_0 = arith.constant 0 : i32
    %c0_i32_1 = arith.constant 0 : i32
    return %c0_i32, %c0_i32_0 : i32, i32
  }
  func.func @transform_2(%arg0: i32, %arg1: i32) -> (i32, i32) {
    %c0_i32 = arith.constant 0 : i32
    %c0_i32_0 = arith.constant 0 : i32
    %c0_i32_1 = arith.constant 0 : i32
    return %c0_i32, %c0_i32_0 : i32, i32
  }
  func.func @transform_3(%arg0: i32, %arg1: i32) -> (i32, i32) {
    %c0_i32 = arith.constant 0 : i32
    %c0_i32_0 = arith.constant 0 : i32
    return %c0_i32, %arg1 : i32, i32
  }
  func.func @transform_4(%arg0: i32, %arg1: i32) -> (i32, i32) {
    %c0_i32 = arith.constant 0 : i32
    %c0_i32_0 = arith.constant 0 : i32
    return %c0_i32, %arg1 : i32, i32
  }
  func.func @transform_5(%arg0: i32, %arg1: i32) -> (i32, i32) {
    %c0_i32 = arith.constant 0 : i32
    return %arg0, %arg1 : i32, i32
  }
}

</mosaic_0001>

<llo_original>
// kernel: tpu_custom_call.1
$region0: #{tpu_custom_call.1}
  #allocation0 [shape = 'u32[]', space=smem, size = 0x4, offset = 0x4, fixed_abs, tag = 'smem constant byte address 0x4 - core index']
  #allocation1 [shape = 'u32[72,128]{1,0:T(1,128)}', space=vmem, size = 0x9000, scoped, tag = 'internal scratch']
  %s0 = inlined_call_operand.hbm [shape: bf16[16,128], index: 0, kind: input, shape index: {}]
  %s1 = inlined_call_operand.hbm [shape: bf16[128,128], index: 1, kind: input, shape index: {}]
  %s2 = inlined_call_operand.vmem [shape: f32[1,128], index: 2, kind: input, shape index: {}]
  %s3 = inlined_call_operand.hbm [shape: bf16[128,128], index: 3, kind: input, shape index: {}]
  %s4 = inlined_call_operand.vmem [shape: f32[1,128], index: 4, kind: input, shape index: {}]
  %s5 = inlined_call_operand.hbm [shape: f32[16,128], index: 5, kind: output, shape index: {}]
  %s6 = sld [smem:[#allocation0]]
  $region42: #{tpu_custom_call.1} parent=0
    _
  %s8 = ssub.s32 1, %s6
  %s9 = scalar_select 0, %s8, %s6
  $region1: #{tpu_custom_call.1} parent=0
    #allocation2 [shape = 'u8[4096]{0}', space=vmem, size = 0x1000, scoped, tag = 'input window, operand 0, single buffered']
    #allocation3 [shape = 's32[1]{0}', space=sflag, size = 0x4, scoped, tag = 'scoped memory for tpu_custom_call.1']
    #allocation4 [shape = 's32[1]{0}', space=sflag, size = 0x4, scoped, tag = 'scoped memory for tpu_custom_call.1']
    #allocation5 [shape = 'u8[32768]{0}', space=vmem, size = 0x8000, scoped, tag = 'input window, operand 1, single buffered']
    #allocation6 [shape = 's32[1]{0}', space=sflag, size = 0x4, scoped, tag = 'scoped memory for tpu_custom_call.1']
    #allocation7 [shape = 'u8[32768]{0}', space=vmem, size = 0x8000, scoped, tag = 'input window, operand 3, single buffered']
    #allocation8 [shape = 'u8[8192]{0}', space=vmem, size = 0x2000, scoped, tag = 'output window, operand 0, single buffered']
    %10 = vsyncpa [#allocation3], 0
    %11 = vsyncpa [#allocation6], 0
    %12 = vsyncpa [#allocation4], 0
    // Predicated region
    $region2: #{tpu_custom_call.1} parent=1 // pred_check
      _
    $region3: #{tpu_custom_call.1} parent=1 // pred_check_branch
      %14 = sbr.rel (0) target = $region5
    $region4: #{tpu_custom_call.1} parent=1 // pred_region
      %16 = vsyncadd [#allocation3], 0
      %s17 = sshll.u32 %s0, 4
      %s18 = int_to_ptr.hbm [resolvable:$true] %s17
      %s19 = sshll.u32 [#allocation2], 4
      %s20 = int_to_ptr.vmem [resolvable:$true] %s19
      %25 = dma.hbm_to_vmem [thread:$0]  %s18, 128, %s20, [#allocation3], 64, 64, 4
    $region5: #{tpu_custom_call.1} parent=1 // pred_fallthru
      _
    // Predicated region
    $region6: #{tpu_custom_call.1} parent=1 // pred_check
      _
    $region7: #{tpu_custom_call.1} parent=1 // pred_check_branch
      %27 = sbr.rel (0) target = $region9
    $region8: #{tpu_custom_call.1} parent=1 // pred_region
      %29 = vsyncadd [#allocation6], 0
      %s30 = sshll.u32 %s1, 4
      %s31 = int_to_ptr.hbm [resolvable:$true] %s30
      %s32 = sshll.u32 [#allocation5], 4
      %s33 = int_to_ptr.vmem [resolvable:$true] %s32
      %38 = dma.hbm_to_vmem [thread:$0]  %s31, 1024, %s33, [#allocation6], 64, 64, 4
    $region9: #{tpu_custom_call.1} parent=1 // pred_fallthru
      _
    // Predicated region
    $region10: #{tpu_custom_call.1} parent=1 // pred_check
      _
    $region11: #{tpu_custom_call.1} parent=1 // pred_check_branch
      %40 = sbr.rel (0) target = $region13
    $region12: #{tpu_custom_call.1} parent=1 // pred_region
      _
    $region13: #{tpu_custom_call.1} parent=1 // pred_fallthru
      _
    // Predicated region
    $region14: #{tpu_custom_call.1} parent=1 // pred_check
      _
    $region15: #{tpu_custom_call.1} parent=1 // pred_check_branch
      %42 = sbr.rel (0) target = $region17
    $region16: #{tpu_custom_call.1} parent=1 // pred_region
      %44 = vsyncadd [#allocation6], 0
      %s45 = sshll.u32 %s3, 4
      %s46 = int_to_ptr.hbm [resolvable:$true] %s45
      %s47 = sshll.u32 [#allocation7], 4
      %s48 = int_to_ptr.vmem [resolvable:$true] %s47
      %53 = dma.hbm_to_vmem [thread:$0]  %s46, 1024, %s48, [#allocation6], 64, 64, 4
    $region17: #{tpu_custom_call.1} parent=1 // pred_fallthru
      _
    // Predicated region
    $region18: #{tpu_custom_call.1} parent=1 // pred_check
      _
    $region19: #{tpu_custom_call.1} parent=1 // pred_check_branch
      %55 = sbr.rel (0) target = $region21
    $region20: #{tpu_custom_call.1} parent=1 // pred_region
      _
    $region21: #{tpu_custom_call.1} parent=1 // pred_fallthru
      _
    // Predicated region
    $region22: #{tpu_custom_call.1} parent=1 // pred_check
      _
    $region23: #{tpu_custom_call.1} parent=1 // pred_check_branch
      %57 = sbr.rel (0) target = $region25
    $region24: #{tpu_custom_call.1} parent=1 // pred_region
      %59 = dma.done [#allocation3], 128
    $region25: #{tpu_custom_call.1} parent=1 // pred_fallthru
      _
    // Predicated region
    $region26: #{tpu_custom_call.1} parent=1 // pred_check
      _
    $region27: #{tpu_custom_call.1} parent=1 // pred_check_branch
      %61 = sbr.rel (0) target = $region29
    $region28: #{tpu_custom_call.1} parent=1 // pred_region
      %63 = dma.done [#allocation6], 1024
    $region29: #{tpu_custom_call.1} parent=1 // pred_fallthru
      _
    // Predicated region
    $region30: #{tpu_custom_call.1} parent=1 // pred_check
      _
    $region31: #{tpu_custom_call.1} parent=1 // pred_check_branch
      %65 = sbr.rel (0) target = $region33
    $region32: #{tpu_custom_call.1} parent=1 // pred_region
      %67 = dma.done [#allocation6], 1024
    $region33: #{tpu_custom_call.1} parent=1 // pred_fallthru
      _
    %v68 = vld [vmem:[#allocation2] sm:$0xf]
    %v69 = vld [vmem:[#allocation2 + $0x4] sm:$0xf]
    %v70 = vld [vmem:[#allocation5] sm:$0xf]
    %v71 = vld [vmem:[#allocation5 + $0x4] sm:$0xf]
    %v72 = vld [vmem:[#allocation5 + $0x8] sm:$0xf]
    %v73 = vld [vmem:[#allocation5 + $0xc] sm:$0xf]
    %v74 = vld [vmem:[#allocation5 + $0x10] sm:$0xf]
    %v75 = vld [vmem:[#allocation5 + $0x14] sm:$0xf]
    %v76 = vld [vmem:[#allocation5 + $0x18] sm:$0xf]
    %v77 = vld [vmem:[#allocation5 + $0x1c] sm:$0xf]
    %v78 = vld [vmem:[#allocation5 + $0x20] sm:$0xf]
    %v79 = vld [vmem:[#allocation5 + $0x24] sm:$0xf]
    %v80 = vld [vmem:[#allocation5 + $0x28] sm:$0xf]
    %v81 = vld [vmem:[#allocation5 + $0x2c] sm:$0xf]
    %v82 = vld [vmem:[#allocation5 + $0x30] sm:$0xf]
    %v83 = vld [vmem:[#allocation5 + $0x34] sm:$0xf]
    %v84 = vld [vmem:[#allocation5 + $0x38] sm:$0xf]
    %v85 = vld [vmem:[#allocation5 + $0x3c] sm:$0xf]
    %v86 = vld [vmem:[%s2] sm:$0x1]
    %v88 = vperm.slane %v86, 0
    %v92 = vunpack.c.l.b16 %v68
    %v93 = vunpack.c.l.b16 %v69
    %v94 = vpack.c.b16 %v93, %v92
    %v112 = vunpack.c.l.b16 %v70
    %v113 = vunpack.c.l.b16 %v71
    %v114 = vunpack.c.l.b16 %v72
    %v115 = vunpack.c.l.b16 %v73
    %v116 = vunpack.c.l.b16 %v74
    %v117 = vunpack.c.l.b16 %v75
    %v118 = vunpack.c.l.b16 %v76
    %v119 = vunpack.c.l.b16 %v77
    %v120 = vunpack.c.l.b16 %v78
    %v121 = vunpack.c.l.b16 %v79
    %v122 = vunpack.c.l.b16 %v80
    %v123 = vunpack.c.l.b16 %v81
    %v124 = vunpack.c.l.b16 %v82
    %v125 = vunpack.c.l.b16 %v83
    %v126 = vunpack.c.l.b16 %v84
    %v127 = vunpack.c.l.b16 %v85
    %v128 = vpack.c.b16 %v113, %v112
    %v129 = vpack.c.b16 %v115, %v114
    %v130 = vpack.c.b16 %v117, %v116
    %v131 = vpack.c.b16 %v119, %v118
    %v132 = vpack.c.b16 %v121, %v120
    %v133 = vpack.c.b16 %v123, %v122
    %v134 = vpack.c.b16 %v125, %v124
    %v135 = vpack.c.b16 %v127, %v126
    %144 = vmatpush.bf16.msra.mxu0 %v135
    %145 = vmatpush.bf16.msra.mxu0 %v134
    %146 = vmatpush.bf16.msra.mxu0 %v133
    %147 = vmatpush.bf16.msra.mxu0 %v132
    %148 = vmatpush.bf16.msra.mxu0 %v131
    %149 = vmatpush.bf16.msra.mxu0 %v130
    %150 = vmatpush.bf16.msra.mxu0 %v129
    %151 = vmatpush.bf16.msra.mxu0 %v128
    %152 = vmatmul.bf16.gmra.mxu0 %v94
    %v153 = vpop.f32.mrf.mxu0
    %v154 = vadd.f32 %v88, %v153
    %v155 = vpop.f32.mrf.mxu0
    %v156 = vadd.f32 %v88, %v155
    %157 = vdwg.mxu0
    %v158 = vmax.f32 %v154, 0.0
    %v159 = vmax.f32 %v156, 0.0
    %v160 = vpack.c.bf16 %v159, %v158
    %v161 = vld [vmem:[#allocation7] sm:$0xf]
    %v162 = vld [vmem:[#allocation7 + $0x4] sm:$0xf]
    %v163 = vld [vmem:[#allocation7 + $0x8] sm:$0xf]
    %v164 = vld [vmem:[#allocation7 + $0xc] sm:$0xf]
    %v165 = vld [vmem:[#allocation7 + $0x10] sm:$0xf]
    %v166 = vld [vmem:[#allocation7 + $0x14] sm:$0xf]
    %v167 = vld [vmem:[#allocation7 + $0x18] sm:$0xf]
    %v168 = vld [vmem:[#allocation7 + $0x1c] sm:$0xf]
    %v169 = vld [vmem:[#allocation7 + $0x20] sm:$0xf]
    %v170 = vld [vmem:[#allocation7 + $0x24] sm:$0xf]
    %v171 = vld [vmem:[#allocation7 + $0x28] sm:$0xf]
    %v172 = vld [vmem:[#allocation7 + $0x2c] sm:$0xf]
    %v173 = vld [vmem:[#allocation7 + $0x30] sm:$0xf]
    %v174 = vld [vmem:[#allocation7 + $0x34] sm:$0xf]
    %v175 = vld [vmem:[#allocation7 + $0x38] sm:$0xf]
    %v176 = vld [vmem:[#allocation7 + $0x3c] sm:$0xf]
    %v177 = vld [vmem:[%s4] sm:$0x1]
    %v179 = vperm.slane %v177, 0
    %v197 = vunpack.c.l.b16 %v161
    %v198 = vunpack.c.l.b16 %v162
    %v199 = vunpack.c.l.b16 %v163
    %v200 = vunpack.c.l.b16 %v164
    %v201 = vunpack.c.l.b16 %v165
    %v202 = vunpack.c.l.b16 %v166
    %v203 = vunpack.c.l.b16 %v167
    %v204 = vunpack.c.l.b16 %v168
    %v205 = vunpack.c.l.b16 %v169
    %v206 = vunpack.c.l.b16 %v170
    %v207 = vunpack.c.l.b16 %v171
    %v208 = vunpack.c.l.b16 %v172
    %v209 = vunpack.c.l.b16 %v173
    %v210 = vunpack.c.l.b16 %v174
    %v211 = vunpack.c.l.b16 %v175
    %v212 = vunpack.c.l.b16 %v176
    %v213 = vpack.c.b16 %v198, %v197
    %v214 = vpack.c.b16 %v200, %v199
    %v215 = vpack.c.b16 %v202, %v201
    %v216 = vpack.c.b16 %v204, %v203
    %v217 = vpack.c.b16 %v206, %v205
    %v218 = vpack.c.b16 %v208, %v207
    %v219 = vpack.c.b16 %v210, %v209
    %v220 = vpack.c.b16 %v212, %v211
    %229 = vmatpush.bf16.msra.mxu0 %v220
    %230 = vmatpush.bf16.msra.mxu0 %v219
    %231 = vmatpush.bf16.msra.mxu0 %v218
    %232 = vmatpush.bf16.msra.mxu0 %v217
    %233 = vmatpush.bf16.msra.mxu0 %v216
    %234 = vmatpush.bf16.msra.mxu0 %v215
    %235 = vmatpush.bf16.msra.mxu0 %v214
    %236 = vmatpush.bf16.msra.mxu0 %v213
    %237 = vmatmul.bf16.gmra.mxu0 %v160
    %v238 = vpop.f32.mrf.mxu0
    %v239 = vadd.f32 %v179, %v238
    %v240 = vpop.f32.mrf.mxu0
    %v241 = vadd.f32 %v179, %v240
    %242 = vdwg.mxu0
    %243 = vst [vmem:[#allocation8] sm:$0xff] %v239
    %244 = vst [vmem:[#allocation8 + $0x8] sm:$0xff] %v241
    // Predicated region
    $region34: #{tpu_custom_call.1} parent=1 // pred_check
      _
    $region35: #{tpu_custom_call.1} parent=1 // pred_check_branch
      %246 = sbr.rel (0) target = $region37
    $region36: #{tpu_custom_call.1} parent=1 // pred_region
      %248 = vsyncadd [#allocation4], 0
      %s249 = sshll.u32 [#allocation8], 4
      %s250 = int_to_ptr.vmem [resolvable:$true] %s249
      %s251 = sshll.u32 %s5, 4
      %s252 = int_to_ptr.hbm [resolvable:$true] %s251
      %257 = dma.vmem_to_hbm [thread:$0]  %s250, 256, %s252, [#allocation4], 128, 128, 8
    $region37: #{tpu_custom_call.1} parent=1 // pred_fallthru
      _
    // Predicated region
    $region38: #{tpu_custom_call.1} parent=1 // pred_check
      _
    $region39: #{tpu_custom_call.1} parent=1 // pred_check_branch
      %259 = sbr.rel (0) target = $region41
    $region40: #{tpu_custom_call.1} parent=1 // pred_region
      %261 = dma.done [#allocation4], 256
    $region41: #{tpu_custom_call.1} parent=1 // pred_fallthru
      _
    %262 = vsyncpa [#allocation3], 1
    %263 = vsyncpa [#allocation6], 1
    %264 = vsyncpa [#allocation4], 1

</llo_original>
